<compile_context>
chip_gen: v7x
topology: tpu7x:2x2x1
jax: 0.10.0
libtpu: 0.0.40
codegen_flags: <defaults>
</compile_context>

<pallas_src>
import functools

import jax
import jax.numpy as jnp
from jax import lax
from jax.experimental import pallas as pl
from jax.experimental.pallas import tpu as pltpu


def _round_up(x, m):
    return (x + m - 1) // m * m


def _vmem_physical_bytes():
    # Conservative fallback (v7x per-TC size) if the query is unavailable.
    try:
        return int(pltpu.get_tpu_info().vmem_capacity_bytes)
    except Exception:
        return 64 * 1024 * 1024


# ---------------------------------------------------------------------------
# Pallas kernel: sub-pixel GEMM (bf16 output) + per-tile partial BN statistics
# ---------------------------------------------------------------------------
def _convt_stats_kernel(p_ref, w_ref, y_ref, stats_ref):
    # (tm, Kp) bf16 @ (Kp, Ctot) bf16 -> f32 accumulation on the MXU.
    y = jnp.dot(p_ref[...], w_ref[...], preferred_element_type=jnp.float32)
    # HBM-write-bound kernel: store the pre-BN activations in bf16.
    y_ref[...] = y.astype(y_ref.dtype)

    # Per-tile partial column sums / sums of squares reduced from the f32
    # accumulator (stats precision unaffected by the bf16 y store).
    # Even rows = sum, odd rows = sum of squares (one dense (8, Ctot) write).
    # Each tile writes its own rows -> no cross-iteration dependency, the grid
    # axis stays "parallel" (megacore-friendly on v7x).
    s = jnp.sum(y, axis=0, keepdims=True)        # (1, Ctot)
    q = jnp.sum(y * y, axis=0, keepdims=True)    # (1, Ctot)
    row = lax.broadcasted_iota(jnp.int32, stats_ref.shape, 0)
    stats_ref[...] = jnp.where((row % 2) == 0,
                               jnp.broadcast_to(s, stats_ref.shape),
                               jnp.broadcast_to(q, stats_ref.shape))


# ---------------------------------------------------------------------------
# Host-side helpers
# ---------------------------------------------------------------------------
def _im2col_3x3(x_nchw):
    """(N, Cin, H, W) -> (N*H*W, 9*Cin) patches of the 1-padded NHWC input."""
    n, cin, h, w = x_nchw.shape
    xp = jnp.pad(jnp.transpose(x_nchw, (0, 2, 3, 1)),
                 ((0, 0), (1, 1), (1, 1), (0, 0)))            # (N, H+2, W+2, Cin)
    cols = [xp[:, a:a + h, b:b + w, :] for a in range(3) for b in range(3)]
    pat = jnp.stack(cols, axis=3)                             # (N, H, W, 9, Cin)
    return pat.reshape(n * h * w, 9 * cin)


def _build_subpixel_weight(conv_w, kp, ctot, dtype):
    """PyTorch ConvTranspose2d weight (Cin, Cout, 4, 4) -> (Kp, Ctot).

    Column co*4 + dy*2 + dx produces output pixel (2m+dy, 2w+dx) of channel co
    from the 3x3 window (offsets a, b) of the padded input, using transposed-conv
    tap (kh, kw) = (3+dy-2a, 3+dx-2b) for a in {dy, dy+1}, b in {dx, dx+1}.
    Remaining taps / padded rows / padded columns are zero.
    """
    cin, cout = conv_w.shape[0], conv_w.shape[1]
    wfull = jnp.zeros((3, 3, cin, cout, 2, 2), jnp.float32)
    for dy in range(2):
        for dx in range(2):
            for a in (dy, dy + 1):
                for b in (dx, dx + 1):
                    kh = 3 + dy - 2 * a
                    kw = 3 + dx - 2 * b
                    wfull = wfull.at[a, b, :, :, dy, dx].set(conv_w[:, :, kh, kw])
    wmat = wfull.reshape(9 * cin, 4 * cout)
    wmat = jnp.pad(wmat, ((0, kp - 9 * cin), (0, ctot - 4 * cout)))
    return wmat.astype(dtype)


# ---------------------------------------------------------------------------
# Public wrapper: ConvTranspose2d(4, 2, 1) -> BatchNorm2d (train) -> ReLU
# ---------------------------------------------------------------------------
@functools.partial(jax.jit, static_argnames=("tm", "eps", "compute_dtype"))
def downsample_block_forward(x, conv_w, conv_b, gamma, beta, *,
                             tm=512, eps=1e-5, compute_dtype=jnp.bfloat16):
    """x: (N, Cin, H, W) f32; conv_w: (Cin, Cout, 4, 4); returns (N, Cout, 2H, 2W)."""
    del conv_b  # cancels exactly through training-mode BatchNorm (mean subtraction)

    n, cin, h, w = x.shape
    cout = conv_w.shape[1]
    k = 9 * cin
    kp = _round_up(k, 128)                # lane-dense K (zero-row padded)
    ctot = _round_up(4 * cout, 128)       # lane-dense output columns
    m = n * h * w

    # ---- per-generation VMEM budget & row-tile choice -----------------------
    phys = _vmem_physical_bytes()
    # ~40 MiB on v7x (64 MiB/TC), up to 64 MiB on v5e/v6e (128 MiB physical).
    vmem_cap = min(phys * 5 // 8, 64 * 1024 * 1024)

    tm = max(256, min(tm, _round_up(m, 256)))
    if m > 256:                            # keep >= 2 grid steps (v7x megacore)
        tm = min(tm, _round_up((m + 1) // 2, 256))

    def _working_set(t):
        # double-buffered patch + y streams, weight (x2), stats tile (x2),
        # plus the f32 matmul accumulator.
        return (2 * t * kp * 2 + 2 * kp * ctot * 2 + 2 * t * ctot * 2
                + 2 * 8 * ctot * 4 + t * ctot * 4)

    while tm > 256 and _working_set(tm) > vmem_cap:
        tm -= 256

    mp = _round_up(m, tm)                  # pad M instead of asserting M % tm == 0
    g = mp // tm

    # ---- operands ------------------------------------------------------------
    # bf16 im2col: halves the materialized (M, 9*Cin) HBM intermediate.
    patches = _im2col_3x3(x.astype(compute_dtype))
    patches = jnp.pad(patches, ((0, mp - m), (0, kp - k)))    # zero rows/cols: no-ops
    wmat = _build_subpixel_weight(conv_w, kp, ctot, compute_dtype)

    itm = patches.dtype.itemsize
    cost = pl.CostEstimate(
        flops=2 * mp * kp * ctot,
        transcendentals=0,
        bytes_accessed=(mp * kp + kp * ctot) * itm + mp * ctot * itm
                       + 8 * g * ctot * 4,
    )
    vmem_limit = int(min(max(int(1.5 * _working_set(tm)), 16 * 1024 * 1024), vmem_cap))

    y, stats = pl.pallas_call(
        _convt_stats_kernel,
        out_shape=(
            jax.ShapeDtypeStruct((mp, ctot), compute_dtype),     # pre-BN conv output (bf16)
            jax.ShapeDtypeStruct((8 * g, ctot), jnp.float32),    # per-tile [sum; sumsq; ...]
        ),
        grid_spec=pltpu.PrefetchScalarGridSpec(
            num_scalar_prefetch=0,
            grid=(g,),
            in_specs=[
                pl.BlockSpec((tm, kp), lambda i: (i, 0)),        # patch tile
                pl.BlockSpec((kp, ctot), lambda i: (0, 0)),      # resident weight
            ],
            out_specs=(
                pl.BlockSpec((tm, ctot), lambda i: (i, 0)),
                pl.BlockSpec((8, ctot), lambda i: (i, 0)),
            ),
        ),
        compiler_params=pltpu.CompilerParams(
            dimension_semantics=("parallel",),
            vmem_limit_bytes=vmem_limit,
        ),
        cost_estimate=cost,
    )(patches, wmat)

    # Tiny per-channel BN math (training-mode batch stats over N*2H*2W elements),
    # reduced from the f32 per-tile partials.
    st = stats.reshape(g, 8, ctot)
    col_sum = st[:, 0, :].sum(axis=0)[: 4 * cout]
    col_sq = st[:, 1, :].sum(axis=0)[: 4 * cout]
    cnt = 4.0 * m                                   # = N * (2H) * (2W) per channel
    mean = col_sum.reshape(cout, 4).sum(axis=1) / cnt
    # Single-pass E[y^2]-E[y]^2 in f32; fine here (conv output is ~zero-mean).
    # TODO(synk): switch to a centered second pass if |mean| >> std for huge batches.
    var = jnp.maximum(col_sq.reshape(cout, 4).sum(axis=1) / cnt - mean * mean, 0.0)
    scale = gamma * lax.rsqrt(var + eps)
    shift = beta - mean * scale

    # BN + ReLU + pixel-shuffle back to NCHW in one XLA-fused pass over bf16 y.
    yv = y[:m, : 4 * cout].reshape(n, h, w, cout, 2, 2).astype(jnp.float32)
    out = jnp.maximum(
        yv * scale[None, None, None, :, None, None]
        + shift[None, None, None, :, None, None], 0.0)
    out = jnp.transpose(out, (0, 3, 1, 4, 2, 5)).reshape(n, cout, 2 * h, 2 * w)
    return out


# ---------------------------------------------------------------------------
# Pure-JAX reference matching the PyTorch module (training-mode forward)
# ---------------------------------------------------------------------------
def _reference(x, conv_w, conv_b, gamma, beta, eps=1e-5):
    # ConvTranspose2d(k=4, s=2, p=1) == conv with lhs_dilation=2, pad k-1-p=2,
    # and the (Cin, Cout, KH, KW) kernel transposed + spatially flipped.
    w_conv = jnp.transpose(conv_w, (1, 0, 2, 3))[:, :, ::-1, ::-1]
    y = lax.conv_general_dilated(
        x, w_conv, window_strides=(1, 1), padding=((2, 2), (2, 2)),
        lhs_dilation=(2, 2), dimension_numbers=("NCHW", "OIHW", "NCHW"),
    ) + conv_b.reshape(1, -1, 1, 1)
    mean = jnp.mean(y, axis=(0, 2, 3), keepdims=True)
    var = jnp.mean((y - mean) ** 2, axis=(0, 2, 3), keepdims=True)
    yn = (y - mean) * lax.rsqrt(var + eps)
    return jnp.maximum(yn * gamma.reshape(1, -1, 1, 1) + beta.reshape(1, -1, 1, 1), 0.0)


if __name__ == "__main__":
    key = jax.random.PRNGKey(0)
    k_x, k_w, k_b, k_g, k_be = jax.random.split(key, 5)

    N, Cin, H, W = 2, 4, 16, 16
    Cout, KH, KW = 8, 4, 4

    x = jax.random.normal(k_x, (N, Cin, H, W), dtype=jnp.float32)
    # Deterministic synthetic parameters (shapes per nn.ConvTranspose2d / nn.BatchNorm2d).
    bound = 1.0 / ((Cin * KH * KW) ** 0.5)
    conv_w = jax.random.uniform(k_w, (Cin, Cout, KH, KW), jnp.float32, -bound, bound)
    conv_b = jax.random.uniform(k_b, (Cout,), jnp.float32, -bound, bound)
    gamma = 1.0 + 0.1 * jax.random.normal(k_g, (Cout,), jnp.float32)
    beta = 0.1 * jax.random.normal(k_be, (Cout,), jnp.float32)

    out = downsample_block_forward(x, conv_w, conv_b, gamma, beta)
    out = jax.block_until_ready(out)

    ref = _reference(x, conv_w, conv_b, gamma, beta)
    assert out.shape == (N, Cout, 2 * H, 2 * W), out.shape
    max_err = float(jnp.max(jnp.abs(out - ref)))
    mean_err = float(jnp.mean(jnp.abs(out - ref)))
    # bf16 MXU inputs + bf16 y storage with f32 accumulation/stats; outputs are
    # BN-normalized (O(1)), so errors scale with 1/std of the conv output.
    assert max_err < 1e-1, (max_err, mean_err)
    assert mean_err < 2e-2, (max_err, mean_err)

    print("KERNEL_OK")
</pallas_src>

<mosaic_0001>
module attributes {stable_mosaic.version = 11 : i64} {
  func.func @_convt_stats_kernel(%arg0: i32, %arg1: memref<256x128xbf16, #tpu.memory_space<vmem>>, %arg2: memref<128x128xbf16, #tpu.memory_space<vmem>>, %arg3: memref<256x128xbf16, #tpu.memory_space<vmem>>, %arg4: memref<8x128xf32, #tpu.memory_space<vmem>>) attributes {dimension_semantics = [#tpu.dimension_semantics<parallel>], iteration_bounds = array<i64: 2>, scalar_prefetch = 0 : i64, scratch_operands = 0 : i64, tpu.core_type = #tpu.core_type<tc>, window_params = [{transform_indices = @transform_0, window_bounds = array<i64: 256, 128>}, {pipeline_mode = #tpu.pipeline_mode<synchronous>, transform_indices = @transform_1, window_bounds = array<i64: 128, 128>}, {transform_indices = @transform_2, window_bounds = array<i64: 256, 128>}, {transform_indices = @transform_3, window_bounds = array<i64: 8, 128>}]} {
    %c0 = arith.constant 0 : index
    %c0_0 = arith.constant 0 : index
    %0 = vector.load %arg1[%c0, %c0_0] : memref<256x128xbf16, #tpu.memory_space<vmem>>, vector<256x128xbf16>
    %c0_1 = arith.constant 0 : index
    %c0_2 = arith.constant 0 : index
    %1 = vector.load %arg2[%c0_1, %c0_2] : memref<128x128xbf16, #tpu.memory_space<vmem>>, vector<128x128xbf16>
    %cst = arith.constant dense<0.000000e+00> : vector<256x128xf32>
    %2 = tpu.matmul %0, %1, %cst {dimension_numbers = #tpu.dot_dimension_numbers<[1], [0], [0], [1], [0, 0, 1, 1], [], []>} : vector<256x128xbf16>, vector<128x128xbf16>, vector<256x128xf32> -> vector<256x128xf32>
    %3 = arith.truncf %2 : vector<256x128xf32> to vector<256x128xbf16>
    %c0_3 = arith.constant 0 : index
    %c0_4 = arith.constant 0 : index
    %4 = vector.load %arg3[%c0_3, %c0_4] : memref<256x128xbf16, #tpu.memory_space<vmem>>, vector<256x128xbf16>
    tpu.vector_store %arg3[%c0_3, %c0_4], %3 {strides = array<i32>} : memref<256x128xbf16, #tpu.memory_space<vmem>>, vector<256x128xbf16>,
    %cst_5 = arith.constant dense<0.000000e+00> : vector<128xf32>
    %5 = vector.multi_reduction <add>, %2, %cst_5 [0] : vector<256x128xf32> to vector<128xf32>
    %6 = vector.shape_cast %5 : vector<128xf32> to vector<1x128xf32>
    %7 = arith.mulf %2, %2 : vector<256x128xf32>
    %cst_6 = arith.constant dense<0.000000e+00> : vector<128xf32>
    %8 = vector.multi_reduction <add>, %7, %cst_6 [0] : vector<256x128xf32> to vector<128xf32>
    %9 = vector.shape_cast %8 : vector<128xf32> to vector<1x128xf32>
    %10 = tpu.iota {dimensions = array<i32: 0>} : vector<8x128xi32>
    %c2_i32 = arith.constant 2 : i32
    %c0_i32 = arith.constant 0 : i32
    %11 = arith.cmpi eq, %c2_i32, %c0_i32 : i32
    %c1_i32 = arith.constant 1 : i32
    %12 = arith.select %11, %c1_i32, %c2_i32 : i32
    %13 = vector.broadcast %12 : i32 to vector<8x128xi32>
    %14 = arith.remsi %10, %13 : vector<8x128xi32>
    %c0_i32_7 = arith.constant 0 : i32
    %15 = vector.broadcast %c0_i32_7 : i32 to vector<8x128xi32>
    %16 = arith.cmpi ne, %14, %15 : vector<8x128xi32>
    %c0_i32_8 = arith.constant 0 : i32
    %17 = vector.broadcast %c0_i32_8 : i32 to vector<8x128xi32>
    %18 = arith.cmpi slt, %14, %17 : vector<8x128xi32>
    %c0_i32_9 = arith.constant 0 : i32
    %19 = arith.cmpi slt, %12, %c0_i32_9 : i32
    %20 = vector.broadcast %19 : i1 to vector<8x128xi1>
    %21 = vector.broadcast %20 : vector<8x128xi1> to vector<8x128xi1>
    %22 = arith.xori %18, %21 : vector<8x128xi1>
    %23 = arith.andi %22, %16 : vector<8x128xi1>
    %24 = vector.broadcast %12 : i32 to vector<8x128xi32>
    %25 = arith.addi %14, %24 : vector<8x128xi32>
    %26 = arith.select %23, %25, %14 : vector<8x128xi1>, vector<8x128xi32>
    %c0_i32_10 = arith.constant 0 : i32
    %27 = vector.broadcast %c0_i32_10 : i32 to vector<8x128xi32>
    %28 = arith.cmpi eq, %26, %27 : vector<8x128xi32>
    %29 = vector.shape_cast %6 : vector<1x128xf32> to vector<1x128xf32>
    %30 = vector.broadcast %29 : vector<1x128xf32> to vector<8x128xf32>
    %31 = vector.shape_cast %9 : vector<1x128xf32> to vector<1x128xf32>
    %32 = vector.broadcast %31 : vector<1x128xf32> to vector<8x128xf32>
    %33 = arith.select %28, %30, %32 : vector<8x128xi1>, vector<8x128xf32>
    %c0_11 = arith.constant 0 : index
    %c0_12 = arith.constant 0 : index
    %34 = vector.load %arg4[%c0_11, %c0_12] : memref<8x128xf32, #tpu.memory_space<vmem>>, vector<8x128xf32>
    tpu.vector_store %arg4[%c0_11, %c0_12], %33 {strides = array<i32>} : memref<8x128xf32, #tpu.memory_space<vmem>>, vector<8x128xf32>,
    return
  }
  func.func @transform_0(%arg0: i32) -> (i32, i32) {
    %c0_i32 = arith.constant 0 : i32
    %c0_i32_0 = arith.constant 0 : i32
    return %arg0, %c0_i32 : i32, i32
  }
  func.func @transform_1(%arg0: i32) -> (i32, i32) {
    %c0_i32 = arith.constant 0 : i32
    %c0_i32_0 = arith.constant 0 : i32
    %c0_i32_1 = arith.constant 0 : i32
    return %c0_i32, %c0_i32_0 : i32, i32
  }
  func.func @transform_2(%arg0: i32) -> (i32, i32) {
    %c0_i32 = arith.constant 0 : i32
    %c0_i32_0 = arith.constant 0 : i32
    return %arg0, %c0_i32 : i32, i32
  }
  func.func @transform_3(%arg0: i32) -> (i32, i32) {
    %c0_i32 = arith.constant 0 : i32
    %c0_i32_0 = arith.constant 0 : i32
    return %arg0, %c0_i32 : i32, i32
  }
}

</mosaic_0001>

<llo_original>
// kernel: downsample_block_forward.1
$region0: #{downsample_block_forward.1}
  #allocation0 [shape = 'u32[]', space=smem, size = 0x4, offset = 0x4, fixed_abs, tag = 'smem constant byte address 0x4 - core index']
  #allocation1 [shape = 'u32[144,128]{1,0:T(1,128)}', space=vmem, size = 0x12000, scoped, tag = 'internal scratch']
  %s0 = inlined_call_operand.vmem [shape: bf16[512,128], index: 0, kind: input, shape index: {}]
  %s1 = inlined_call_operand.vmem [shape: bf16[128,128], index: 1, kind: input, shape index: {}]
  %s2 = inlined_call_operand.vmem [shape: bf16[512,128], index: 2, kind: output, shape index: {0}]
  %s3 = inlined_call_operand.vmem [shape: f32[16,128], index: 3, kind: output, shape index: {1}]
  %4 = xla_tuple %s2, %s3
  %s5 = sld [smem:[#allocation0]]
  $region49: #{downsample_block_forward.1} parent=0
    _
  %s7 = ssub.s32 1, %s5
  %s8 = scalar_select 0, %s7, %s5
  loop: start=0, step=1, limit=4
  $region2: #{downsample_block_forward.1} parent=0 // loop_pre_header
    _
  $region3: #{downsample_block_forward.1} parent=0 // loop_header
    %s10 = sphi 0, %s14
    %p11 = scmp.ge.s32.totalorder %s10, 4
    %s20 = sphi 0, %s22
    %s23 = sphi 0, %s20
    %s24 = sphi 0, %s23
    %s40 = sphi 0, %s24
    %s44 = sphi 0, %s44
    %s46 = sphi 0, %s44
    %s47 = sphi 0, %s46
    %s61 = sphi 0, %s47
    %s67 = sphi 0, %s69
    %s70 = sphi 0, %s67
    %s71 = sphi 0, %s70
    %s87 = sphi 0, %s71
    %s93 = sphi 0, %s95
    %s96 = sphi 0, %s93
    %s97 = sphi 0, %s96
    %s113 = sphi 0, %s97
  $region4: #{downsample_block_forward.1} parent=0 // loop_header_branch
    %13 = sbr.rel (%p11) target = $region8
  $region5: #{downsample_block_forward.1} parent=0 // loop_body
    %s15 = ssub.s32 %s10, 1
    %s16 = ssub.s32 %s10, 2
    %s17 = sadd.s32 %s10, 1
    %s18 = ssub.s32 %s10, %s17
    %p19 = scmp.eq.s32.totalorder %s18, 0
    %s21 = sadd.s32 %s20, 1
    %s22 = scalar_select %p19, %s20, %s21
    %p25 = pneg %p19
    %p26 = scmp.eq.s32.totalorder %s10, 1
    %p27 = por %p25, %p26
    %p28 = scmp.ne.s32.totalorder %s20, %s23
    %p29 = scmp.eq.s32.totalorder %s10, 0
    %p30 = por %p28, %p29
    %p31 = scmp.ne.s32.totalorder %s20, %s23
    %p32 = scmp.eq.s32.totalorder %s15, 1
    %p33 = por %p31, %p32
    %p34 = scmp.ne.s32.totalorder %s23, %s24
    %p35 = scmp.eq.s32.totalorder %s15, 0
    %p36 = por %p34, %p35
    %p37 = scmp.ne.s32.totalorder %s23, %s24
    %p38 = scmp.eq.s32.totalorder %s16, 1
    %p39 = por %p37, %p38
    %p41 = scmp.ne.s32.totalorder %s24, %s40
    %p42 = scmp.eq.s32.totalorder %s16, 0
    %p43 = por %p41, %p42
    %s45 = sadd.s32 %s44, 1
    %p48 = scmp.eq.s32.totalorder %s10, 1
    %p49 = scmp.ne.s32.totalorder %s44, %s46
    %p50 = scmp.eq.s32.totalorder %s10, 0
    %p51 = por %p49, %p50
    %p52 = scmp.ne.s32.totalorder %s44, %s46
    %p53 = scmp.eq.s32.totalorder %s15, 1
    %p54 = por %p52, %p53
    %p55 = scmp.ne.s32.totalorder %s46, %s47
    %p56 = scmp.eq.s32.totalorder %s15, 0
    %p57 = por %p55, %p56
    %p58 = scmp.ne.s32.totalorder %s46, %s47
    %p59 = scmp.eq.s32.totalorder %s16, 1
    %p60 = por %p58, %p59
    %p62 = scmp.ne.s32.totalorder %s47, %s61
    %p63 = scmp.eq.s32.totalorder %s16, 0
    %p64 = por %p62, %p63
    %s65 = ssub.s32 %s10, %s17
    %p66 = scmp.eq.s32.totalorder %s65, 0
    %s68 = sadd.s32 %s67, 1
    %s69 = scalar_select %p66, %s67, %s68
    %p72 = pneg %p66
    %p73 = scmp.eq.s32.totalorder %s10, 1
    %p74 = por %p72, %p73
    %p75 = scmp.ne.s32.totalorder %s67, %s70
    %p76 = scmp.eq.s32.totalorder %s10, 0
    %p77 = por %p75, %p76
    %p78 = scmp.ne.s32.totalorder %s67, %s70
    %p79 = scmp.eq.s32.totalorder %s15, 1
    %p80 = por %p78, %p79
    %p81 = scmp.ne.s32.totalorder %s70, %s71
    %p82 = scmp.eq.s32.totalorder %s15, 0
    %p83 = por %p81, %p82
    %p84 = scmp.ne.s32.totalorder %s70, %s71
    %p85 = scmp.eq.s32.totalorder %s16, 1
    %p86 = por %p84, %p85
    %p88 = scmp.ne.s32.totalorder %s71, %s87
    %p89 = scmp.eq.s32.totalorder %s16, 0
    %p90 = por %p88, %p89
    %s91 = ssub.s32 %s10, %s17
    %p92 = scmp.eq.s32.totalorder %s91, 0
    %s94 = sadd.s32 %s93, 1
    %s95 = scalar_select %p92, %s93, %s94
    %p98 = pneg %p92
    %p99 = scmp.eq.s32.totalorder %s10, 1
    %p100 = por %p98, %p99
    %p101 = scmp.ne.s32.totalorder %s93, %s96
    %p102 = scmp.eq.s32.totalorder %s10, 0
    %p103 = por %p101, %p102
    %p104 = scmp.ne.s32.totalorder %s93, %s96
    %p105 = scmp.eq.s32.totalorder %s15, 1
    %p106 = por %p104, %p105
    %p107 = scmp.ne.s32.totalorder %s96, %s97
    %p108 = scmp.eq.s32.totalorder %s15, 0
    %p109 = por %p107, %p108
    %p110 = scmp.ne.s32.totalorder %s96, %s97
    %p111 = scmp.eq.s32.totalorder %s16, 1
    %p112 = por %p110, %p111
    %p114 = scmp.ne.s32.totalorder %s97, %s113
    %p115 = scmp.eq.s32.totalorder %s16, 0
    %p116 = por %p114, %p115
    %p117 = scmp.le.s32.totalorder 1, %s10
    %p118 = scmp.lt.s32.totalorder %s10, 3
    %p119 = pnand %p117, %p118
    %p120 = pneg %p119
    // Predicated region
    $region9: #{downsample_block_forward.1} parent=5 // pred_check
      _
    $region10: #{downsample_block_forward.1} parent=5 // pred_check_branch
      %122 = sbr.rel (%p119) target = $region12
    $region11: #{downsample_block_forward.1} parent=5 // pred_region
      %s123 = ssub.s32 %s10, 1
      // Predicated region
      $region13: #{downsample_block_forward.1} parent=11 // pred_check
        %p124 = pneg %p57
      $region14: #{downsample_block_forward.1} parent=11 // pred_check_branch
        %126 = sbr.rel (%p124) target = $region16
      $region15: #{downsample_block_forward.1} parent=11 // pred_region
        _
      $region16: #{downsample_block_forward.1} parent=11 // pred_fallthru
        _
    $region12: #{downsample_block_forward.1} parent=5 // pred_fallthru
      _
    %p127 = scmp.lt.s32.totalorder %s10, 2
    // Predicated region
    $region17: #{downsample_block_forward.1} parent=5 // pred_check
      %p128 = pneg %p127
    $region18: #{downsample_block_forward.1} parent=5 // pred_check_branch
      %130 = sbr.rel (%p128) target = $region20
    $region19: #{downsample_block_forward.1} parent=5 // pred_region
      // Predicated region
      $region21: #{downsample_block_forward.1} parent=19 // pred_check
        %p131 = pneg %p30
      $region22: #{downsample_block_forward.1} parent=19 // pred_check_branch
        %133 = sbr.rel (%p131) target = $region24
      $region23: #{downsample_block_forward.1} parent=19 // pred_region
        %s134 = smul.u32 32, %s10
        %p135 = scmp.lt.s32.totalorder %s134, 63
        %s136 = scalar_select %p135, %s134, 63
        %s137 = smul.addr %s136, 4
        %s138 = scalar_lea.vmem %s0, %s137
        %s139 = smul.u32 32, %s10
      $region24: #{downsample_block_forward.1} parent=19 // pred_fallthru
        _
    $region20: #{downsample_block_forward.1} parent=5 // pred_fallthru
      _
    %p140 = scmp.le.s32.totalorder 1, %s10
    %p141 = scmp.lt.s32.totalorder %s10, 3
    %p142 = pnand %p140, %p141
    %p143 = pneg %p142
    // Predicated region
    $region25: #{downsample_block_forward.1} parent=5 // pred_check
      _
    $region26: #{downsample_block_forward.1} parent=5 // pred_check_branch
      %145 = sbr.rel (%p142) target = $region28
    $region27: #{downsample_block_forward.1} parent=5 // pred_region
      %s146 = ssub.s32 %s10, 1
      %s147 = smul.u32 32, %s15
      %p148 = scmp.lt.s32.totalorder %s147, 63
      %s149 = scalar_select %p148, %s147, 63
      %s150 = smul.addr %s149, 4
      %s151 = scalar_lea.vmem %s0, %s150
      %p152 = pneg %p36
      %p153 = pneg %p33
      %p154 = pneg %p57
      %p155 = pneg %p54
      %p156 = pneg %p83
      %p157 = pneg %p80
      %s158 = smul.u32 32, %s15
      %p159 = scmp.lt.s32.totalorder %s158, 63
      %s160 = scalar_select %p159, %s158, 63
      %s161 = smul.addr %s160, 4
      %s162 = scalar_lea.vmem %s2, %s161
      %p163 = pneg %p109
      %p164 = pneg %p106
      %p165 = scmp.lt.s32.totalorder %s15, 1
      %s166 = scalar_select %p165, %s15, 1
      %s167 = smul.addr %s166, 8
      %s168 = scalar_lea.vmem %s3, %s167
      %s169 = smul.u32 32, %s15
      %p170 = scmp.lt.s32.totalorder %s169, 63
      %s171 = scalar_select %p170, %s169, 63
      %s172 = smul.addr %s171, 4
      %s173 = scalar_lea.vmem %s0, %s172
      %s174 = smul.u32 32, %s15
      %s175 = smul.u32 32, %s15
      %p176 = scmp.lt.s32.totalorder %s175, 63
      %s177 = scalar_select %p176, %s175, 63
      %s178 = smul.addr %s177, 4
      %s179 = scalar_lea.vmem %s2, %s178
      %s180 = smul.u32 32, %s15
      %p181 = scmp.lt.s32.totalorder %s15, 1
      %s182 = scalar_select %p181, %s15, 1
      %s183 = smul.addr %s182, 8
      %s184 = scalar_lea.vmem %s3, %s183
      %v186 = vld [vmem:[%s173] sm:$0xf]
      %v187 = vld [vmem:[%s173 + $0x4] sm:$0xf]
      %v188 = vld [vmem:[%s173 + $0x8] sm:$0xf]
      %v189 = vld [vmem:[%s173 + $0xc] sm:$0xf]
      %v190 = vld [vmem:[%s173 + $0x10] sm:$0xf]
      %v191 = vld [vmem:[%s173 + $0x14] sm:$0xf]
      %v192 = vld [vmem:[%s173 + $0x18] sm:$0xf]
      %v193 = vld [vmem:[%s173 + $0x1c] sm:$0xf]
      %v194 = vld [vmem:[%s173 + $0x20] sm:$0xf]
      %v195 = vld [vmem:[%s173 + $0x24] sm:$0xf]
      %v196 = vld [vmem:[%s173 + $0x28] sm:$0xf]
      %v197 = vld [vmem:[%s173 + $0x2c] sm:$0xf]
      %v198 = vld [vmem:[%s173 + $0x30] sm:$0xf]
      %v199 = vld [vmem:[%s173 + $0x34] sm:$0xf]
      %v200 = vld [vmem:[%s173 + $0x38] sm:$0xf]
      %v201 = vld [vmem:[%s173 + $0x3c] sm:$0xf]
      %v202 = vld [vmem:[%s173 + $0x40] sm:$0xf]
      %v203 = vld [vmem:[%s173 + $0x44] sm:$0xf]
      %v204 = vld [vmem:[%s173 + $0x48] sm:$0xf]
      %v205 = vld [vmem:[%s173 + $0x4c] sm:$0xf]
      %v206 = vld [vmem:[%s173 + $0x50] sm:$0xf]
      %v207 = vld [vmem:[%s173 + $0x54] sm:$0xf]
      %v208 = vld [vmem:[%s173 + $0x58] sm:$0xf]
      %v209 = vld [vmem:[%s173 + $0x5c] sm:$0xf]
      %v210 = vld [vmem:[%s173 + $0x60] sm:$0xf]
      %v211 = vld [vmem:[%s173 + $0x64] sm:$0xf]
      %v212 = vld [vmem:[%s173 + $0x68] sm:$0xf]
      %v213 = vld [vmem:[%s173 + $0x6c] sm:$0xf]
      %v214 = vld [vmem:[%s173 + $0x70] sm:$0xf]
      %v215 = vld [vmem:[%s173 + $0x74] sm:$0xf]
      %v216 = vld [vmem:[%s173 + $0x78] sm:$0xf]
      %v217 = vld [vmem:[%s173 + $0x7c] sm:$0xf]
      %v218 = vld [vmem:[%s1] sm:$0xf]
      %v219 = vld [vmem:[%s1 + $0x4] sm:$0xf]
      %v220 = vld [vmem:[%s1 + $0x8] sm:$0xf]
      %v221 = vld [vmem:[%s1 + $0xc] sm:$0xf]
      %v222 = vld [vmem:[%s1 + $0x10] sm:$0xf]
      %v223 = vld [vmem:[%s1 + $0x14] sm:$0xf]
      %v224 = vld [vmem:[%s1 + $0x18] sm:$0xf]
      %v225 = vld [vmem:[%s1 + $0x1c] sm:$0xf]
      %v226 = vld [vmem:[%s1 + $0x20] sm:$0xf]
      %v227 = vld [vmem:[%s1 + $0x24] sm:$0xf]
      %v228 = vld [vmem:[%s1 + $0x28] sm:$0xf]
      %v229 = vld [vmem:[%s1 + $0x2c] sm:$0xf]
      %v230 = vld [vmem:[%s1 + $0x30] sm:$0xf]
      %v231 = vld [vmem:[%s1 + $0x34] sm:$0xf]
      %v232 = vld [vmem:[%s1 + $0x38] sm:$0xf]
      %v233 = vld [vmem:[%s1 + $0x3c] sm:$0xf]
      %v266 = vunpack.c.l.b16 %v186
      %v267 = vunpack.c.l.b16 %v187
      %v268 = vunpack.c.l.b16 %v188
      %v269 = vunpack.c.l.b16 %v189
      %v270 = vunpack.c.l.b16 %v190
      %v271 = vunpack.c.l.b16 %v191
      %v272 = vunpack.c.l.b16 %v192
      %v273 = vunpack.c.l.b16 %v193
      %v274 = vunpack.c.l.b16 %v194
      %v275 = vunpack.c.l.b16 %v195
      %v276 = vunpack.c.l.b16 %v196
      %v277 = vunpack.c.l.b16 %v197
      %v278 = vunpack.c.l.b16 %v198
      %v279 = vunpack.c.l.b16 %v199
      %v280 = vunpack.c.l.b16 %v200
      %v281 = vunpack.c.l.b16 %v201
      %v282 = vunpack.c.l.b16 %v202
      %v283 = vunpack.c.l.b16 %v203
      %v284 = vunpack.c.l.b16 %v204
      %v285 = vunpack.c.l.b16 %v205
      %v286 = vunpack.c.l.b16 %v206
      %v287 = vunpack.c.l.b16 %v207
      %v288 = vunpack.c.l.b16 %v208
      %v289 = vunpack.c.l.b16 %v209
      %v290 = vunpack.c.l.b16 %v210
      %v291 = vunpack.c.l.b16 %v211
      %v292 = vunpack.c.l.b16 %v212
      %v293 = vunpack.c.l.b16 %v213
      %v294 = vunpack.c.l.b16 %v214
      %v295 = vunpack.c.l.b16 %v215
      %v296 = vunpack.c.l.b16 %v216
      %v297 = vunpack.c.l.b16 %v217
      %v298 = vpack.c.b16 %v267, %v266
      %v299 = vpack.c.b16 %v269, %v268
      %v300 = vpack.c.b16 %v271, %v270
      %v301 = vpack.c.b16 %v273, %v272
      %v302 = vpack.c.b16 %v275, %v274
      %v303 = vpack.c.b16 %v277, %v276
      %v304 = vpack.c.b16 %v279, %v278
      %v305 = vpack.c.b16 %v281, %v280
      %v306 = vpack.c.b16 %v283, %v282
      %v307 = vpack.c.b16 %v285, %v284
      %v308 = vpack.c.b16 %v287, %v286
      %v309 = vpack.c.b16 %v289, %v288
      %v310 = vpack.c.b16 %v291, %v290
      %v311 = vpack.c.b16 %v293, %v292
      %v312 = vpack.c.b16 %v295, %v294
      %v313 = vpack.c.b16 %v297, %v296
      %v346 = vunpack.c.l.b16 %v218
      %v347 = vunpack.c.l.b16 %v219
      %v348 = vunpack.c.l.b16 %v220
      %v349 = vunpack.c.l.b16 %v221
      %v350 = vunpack.c.l.b16 %v222
      %v351 = vunpack.c.l.b16 %v223
      %v352 = vunpack.c.l.b16 %v224
      %v353 = vunpack.c.l.b16 %v225
      %v354 = vunpack.c.l.b16 %v226
      %v355 = vunpack.c.l.b16 %v227
      %v356 = vunpack.c.l.b16 %v228
      %v357 = vunpack.c.l.b16 %v229
      %v358 = vunpack.c.l.b16 %v230
      %v359 = vunpack.c.l.b16 %v231
      %v360 = vunpack.c.l.b16 %v232
      %v361 = vunpack.c.l.b16 %v233
      %v362 = vpack.c.b16 %v347, %v346
      %v363 = vpack.c.b16 %v349, %v348
      %v364 = vpack.c.b16 %v351, %v350
      %v365 = vpack.c.b16 %v353, %v352
      %v366 = vpack.c.b16 %v355, %v354
      %v367 = vpack.c.b16 %v357, %v356
      %v368 = vpack.c.b16 %v359, %v358
      %v369 = vpack.c.b16 %v361, %v360
      %378 = vmatprep.subr.bf16.mxu0 0
      %379 = vmatpush1.bf16.msra.mxu0 %v362
      %380 = vmatprep.subr.bf16.mxu0 0
      %381 = vmatpush1.bf16.msra.mxu0 %v363
      %382 = vmatprep.subr.bf16.mxu0 0
      %383 = vmatpush1.bf16.msra.mxu0 %v364
      %384 = vmatprep.subr.bf16.mxu0 0
      %385 = vmatpush1.bf16.msra.mxu0 %v365
      %386 = vmatprep.subr.bf16.mxu0 0
      %387 = vmatpush1.bf16.msra.mxu0 %v366
      %388 = vmatprep.subr.bf16.mxu0 0
      %389 = vmatpush1.bf16.msra.mxu0 %v367
      %390 = vmatprep.subr.bf16.mxu0 0
      %391 = vmatpush1.bf16.msra.mxu0 %v368
      %392 = vmatprep.subr.bf16.mxu0 0
      %393 = vmatpush1.bf16.msra.mxu0 %v369
      %394 = vmatprep.subr.bf16.mxu0 0
      %395 = vmatpush1.bf16.msra.mxu0 0
      %396 = vmatprep.subr.bf16.mxu0 0
      %397 = vmatpush1.bf16.msra.mxu0 0
      %398 = vmatprep.subr.bf16.mxu0 0
      %399 = vmatpush1.bf16.msra.mxu0 0
      %400 = vmatprep.subr.bf16.mxu0 0
      %401 = vmatpush1.bf16.msra.mxu0 0
      %402 = vmatprep.subr.bf16.mxu0 0
      %403 = vmatpush1.bf16.msra.mxu0 0
      %404 = vmatprep.subr.bf16.mxu0 0
      %405 = vmatpush1.bf16.msra.mxu0 0
      %406 = vmatprep.subr.bf16.mxu0 0
      %407 = vmatpush1.bf16.msra.mxu0 0
      %408 = vmatprep.subr.bf16.mxu0 0
      %409 = vmatpush1.bf16.msra.mxu0 0
      %410 = vmatprep.mubr.bf16.mxu0 0
      %411 = vmatmul.mubr.bf16.gmra.mrb[0].mxu0 %v298
      %v412 = vpop.f32.mrb[0].mxu0
      %v413 = vadd.f32 0.0, %v412
      %v414 = vpop.f32.mrb[0].mxu0
      %v415 = vpop.f32.mrb[0].mxu0
      %v416 = vadd.f32 0.0, %v415
      %v417 = vpop.f32.mrb[0].mxu0
      %418 = vmatprep.mubr.bf16.mxu0 0
      %419 = vmatmul.mubr.bf16.gmra.mrb[0].mxu0 %v299
      %v420 = vpop.f32.mrb[0].mxu0
      %v421 = vadd.f32 0.0, %v420
      %v422 = vpop.f32.mrb[0].mxu0
      %v423 = vpop.f32.mrb[0].mxu0
      %v424 = vadd.f32 0.0, %v423
      %v425 = vpop.f32.mrb[0].mxu0
      %426 = vmatprep.mubr.bf16.mxu0 0
      %427 = vmatmul.mubr.bf16.gmra.mrb[0].mxu0 %v300
      %v428 = vpop.f32.mrb[0].mxu0
      %v429 = vadd.f32 0.0, %v428
      %v430 = vpop.f32.mrb[0].mxu0
      %v431 = vpop.f32.mrb[0].mxu0
      %v432 = vadd.f32 0.0, %v431
      %v433 = vpop.f32.mrb[0].mxu0
      %434 = vmatprep.mubr.bf16.mxu0 0
      %435 = vmatmul.mubr.bf16.gmra.mrb[0].mxu0 %v301
      %v436 = vpop.f32.mrb[0].mxu0
      %v437 = vadd.f32 0.0, %v436
      %v438 = vpop.f32.mrb[0].mxu0
      %v439 = vpop.f32.mrb[0].mxu0
      %v440 = vadd.f32 0.0, %v439
      %v441 = vpop.f32.mrb[0].mxu0
      %442 = vmatprep.mubr.bf16.mxu0 0
      %443 = vmatmul.mubr.bf16.gmra.mrb[0].mxu0 %v302
      %v444 = vpop.f32.mrb[0].mxu0
      %v445 = vadd.f32 0.0, %v444
      %v446 = vpop.f32.mrb[0].mxu0
      %v447 = vpop.f32.mrb[0].mxu0
      %v448 = vadd.f32 0.0, %v447
      %v449 = vpop.f32.mrb[0].mxu0
      %450 = vmatprep.mubr.bf16.mxu0 0
      %451 = vmatmul.mubr.bf16.gmra.mrb[0].mxu0 %v303
      %v452 = vpop.f32.mrb[0].mxu0
      %v453 = vadd.f32 0.0, %v452
      %v454 = vpop.f32.mrb[0].mxu0
      %v455 = vpop.f32.mrb[0].mxu0
      %v456 = vadd.f32 0.0, %v455
      %v457 = vpop.f32.mrb[0].mxu0
      %458 = vmatprep.mubr.bf16.mxu0 0
      %459 = vmatmul.mubr.bf16.gmra.mrb[0].mxu0 %v304
      %v460 = vpop.f32.mrb[0].mxu0
      %v461 = vadd.f32 0.0, %v460
      %v462 = vpop.f32.mrb[0].mxu0
      %v463 = vpop.f32.mrb[0].mxu0
      %v464 = vadd.f32 0.0, %v463
      %v465 = vpop.f32.mrb[0].mxu0
      %466 = vmatprep.mubr.bf16.mxu0 0
      %467 = vmatmul.mubr.bf16.gmra.mrb[0].mxu0 %v305
      %v468 = vpop.f32.mrb[0].mxu0
      %v469 = vadd.f32 0.0, %v468
      %v470 = vpop.f32.mrb[0].mxu0
      %v471 = vpop.f32.mrb[0].mxu0
      %v472 = vadd.f32 0.0, %v471
      %v473 = vpop.f32.mrb[0].mxu0
      %474 = vmatprep.mubr.bf16.mxu0 0
      %475 = vmatmul.mubr.bf16.gmra.mrb[0].mxu0 %v306
      %v476 = vpop.f32.mrb[0].mxu0
      %v477 = vadd.f32 0.0, %v476
      %v478 = vpop.f32.mrb[0].mxu0
      %v479 = vpop.f32.mrb[0].mxu0
      %v480 = vadd.f32 0.0, %v479
      %v481 = vpop.f32.mrb[0].mxu0
      %482 = vmatprep.mubr.bf16.mxu0 0
      %483 = vmatmul.mubr.bf16.gmra.mrb[0].mxu0 %v307
      %v484 = vpop.f32.mrb[0].mxu0
      %v485 = vadd.f32 0.0, %v484
      %v486 = vpop.f32.mrb[0].mxu0
      %v487 = vpop.f32.mrb[0].mxu0
      %v488 = vadd.f32 0.0, %v487
      %v489 = vpop.f32.mrb[0].mxu0
      %490 = vmatprep.mubr.bf16.mxu0 0
      %491 = vmatmul.mubr.bf16.gmra.mrb[0].mxu0 %v308
      %v492 = vpop.f32.mrb[0].mxu0
      %v493 = vadd.f32 0.0, %v492
      %v494 = vpop.f32.mrb[0].mxu0
      %v495 = vpop.f32.mrb[0].mxu0
      %v496 = vadd.f32 0.0, %v495
      %v497 = vpop.f32.mrb[0].mxu0
      %498 = vmatprep.mubr.bf16.mxu0 0
      %499 = vmatmul.mubr.bf16.gmra.mrb[0].mxu0 %v309
      %v500 = vpop.f32.mrb[0].mxu0
      %v501 = vadd.f32 0.0, %v500
      %v502 = vpop.f32.mrb[0].mxu0
      %v503 = vpop.f32.mrb[0].mxu0
      %v504 = vadd.f32 0.0, %v503
      %v505 = vpop.f32.mrb[0].mxu0
      %506 = vmatprep.mubr.bf16.mxu0 0
      %507 = vmatmul.mubr.bf16.gmra.mrb[0].mxu0 %v310
      %v508 = vpop.f32.mrb[0].mxu0
      %v509 = vadd.f32 0.0, %v508
      %v510 = vpop.f32.mrb[0].mxu0
      %v511 = vpop.f32.mrb[0].mxu0
      %v512 = vadd.f32 0.0, %v511
      %v513 = vpop.f32.mrb[0].mxu0
      %514 = vmatprep.mubr.bf16.mxu0 0
      %515 = vmatmul.mubr.bf16.gmra.mrb[0].mxu0 %v311
      %v516 = vpop.f32.mrb[0].mxu0
      %v517 = vadd.f32 0.0, %v516
      %v518 = vpop.f32.mrb[0].mxu0
      %v519 = vpop.f32.mrb[0].mxu0
      %v520 = vadd.f32 0.0, %v519
      %v521 = vpop.f32.mrb[0].mxu0
      %522 = vmatprep.mubr.bf16.mxu0 0
      %523 = vmatmul.mubr.bf16.gmra.mrb[0].mxu0 %v312
      %v524 = vpop.f32.mrb[0].mxu0
      %v525 = vadd.f32 0.0, %v524
      %v526 = vpop.f32.mrb[0].mxu0
      %v527 = vpop.f32.mrb[0].mxu0
      %v528 = vadd.f32 0.0, %v527
      %v529 = vpop.f32.mrb[0].mxu0
      %530 = vmatprep.mubr.bf16.mxu0 0
      %531 = vmatmul.mubr.bf16.gmra.mrb[0].mxu0 %v313
      %v532 = vpop.f32.mrb[0].mxu0
      %v533 = vadd.f32 0.0, %v532
      %v534 = vpop.f32.mrb[0].mxu0
      %v535 = vpop.f32.mrb[0].mxu0
      %v536 = vadd.f32 0.0, %v535
      %v537 = vpop.f32.mrb[0].mxu0
      %538 = vdwg.mxu0
      %v539 = vpack.c.bf16 %v416, %v413
      %v540 = vpack.c.bf16 %v424, %v421
      %v541 = vpack.c.bf16 %v432, %v429
      %v542 = vpack.c.bf16 %v440, %v437
      %v543 = vpack.c.bf16 %v448, %v445
      %v544 = vpack.c.bf16 %v456, %v453
      %v545 = vpack.c.bf16 %v464, %v461
      %v546 = vpack.c.bf16 %v472, %v469
      %v547 = vpack.c.bf16 %v480, %v477
      %v548 = vpack.c.bf16 %v488, %v485
      %v549 = vpack.c.bf16 %v496, %v493
      %v550 = vpack.c.bf16 %v504, %v501
      %v551 = vpack.c.bf16 %v512, %v509
      %v552 = vpack.c.bf16 %v520, %v517
      %v553 = vpack.c.bf16 %v528, %v525
      %v554 = vpack.c.bf16 %v536, %v533
      %v571 = vunpack.c.l.b16 %v539
      %v572 = vunpack.c.h.b16 %v539
      %v573 = vunpack.c.l.b16 %v540
      %v574 = vunpack.c.h.b16 %v540
      %v575 = vunpack.c.l.b16 %v541
      %v576 = vunpack.c.h.b16 %v541
      %v577 = vunpack.c.l.b16 %v542
      %v578 = vunpack.c.h.b16 %v542
      %v579 = vunpack.c.l.b16 %v543
      %v580 = vunpack.c.h.b16 %v543
      %v581 = vunpack.c.l.b16 %v544
      %v582 = vunpack.c.h.b16 %v544
      %v583 = vunpack.c.l.b16 %v545
      %v584 = vunpack.c.h.b16 %v545
      %v585 = vunpack.c.l.b16 %v546
      %v586 = vunpack.c.h.b16 %v546
      %v587 = vunpack.c.l.b16 %v547
      %v588 = vunpack.c.h.b16 %v547
      %v589 = vunpack.c.l.b16 %v548
      %v590 = vunpack.c.h.b16 %v548
      %v591 = vunpack.c.l.b16 %v549
      %v592 = vunpack.c.h.b16 %v549
      %v593 = vunpack.c.l.b16 %v550
      %v594 = vunpack.c.h.b16 %v550
      %v595 = vunpack.c.l.b16 %v551
      %v596 = vunpack.c.h.b16 %v551
      %v597 = vunpack.c.l.b16 %v552
      %v598 = vunpack.c.h.b16 %v552
      %v599 = vunpack.c.l.b16 %v553
      %v600 = vunpack.c.h.b16 %v553
      %v601 = vunpack.c.l.b16 %v554
      %v602 = vunpack.c.h.b16 %v554
      %v603 = vpack.c.b16 %v571, %v571
      %v604 = vpack.c.b16 %v572, %v572
      %v605 = vpack.c.b16 %v573, %v573
      %v606 = vpack.c.b16 %v574, %v574
      %v607 = vpack.c.b16 %v575, %v575
      %v608 = vpack.c.b16 %v576, %v576
      %v609 = vpack.c.b16 %v577, %v577
      %v610 = vpack.c.b16 %v578, %v578
      %v611 = vpack.c.b16 %v579, %v579
      %v612 = vpack.c.b16 %v580, %v580
      %v613 = vpack.c.b16 %v581, %v581
      %v614 = vpack.c.b16 %v582, %v582
      %v615 = vpack.c.b16 %v583, %v583
      %v616 = vpack.c.b16 %v584, %v584
      %v617 = vpack.c.b16 %v585, %v585
      %v618 = vpack.c.b16 %v586, %v586
      %v619 = vpack.c.b16 %v587, %v587
      %v620 = vpack.c.b16 %v588, %v588
      %v621 = vpack.c.b16 %v589, %v589
      %v622 = vpack.c.b16 %v590, %v590
      %v623 = vpack.c.b16 %v591, %v591
      %v624 = vpack.c.b16 %v592, %v592
      %v625 = vpack.c.b16 %v593, %v593
      %v626 = vpack.c.b16 %v594, %v594
      %v627 = vpack.c.b16 %v595, %v595
      %v628 = vpack.c.b16 %v596, %v596
      %v629 = vpack.c.b16 %v597, %v597
      %v630 = vpack.c.b16 %v598, %v598
      %v631 = vpack.c.b16 %v599, %v599
      %v632 = vpack.c.b16 %v600, %v600
      %v633 = vpack.c.b16 %v601, %v601
      %v634 = vpack.c.b16 %v602, %v602
      %667 = vst [vmem:[%s179] sm:$0xf] %v603
      %668 = vst [vmem:[%s179 + $0x4] sm:$0xf] %v604
      %669 = vst [vmem:[%s179 + $0x8] sm:$0xf] %v605
      %670 = vst [vmem:[%s179 + $0xc] sm:$0xf] %v606
      %671 = vst [vmem:[%s179 + $0x10] sm:$0xf] %v607
      %672 = vst [vmem:[%s179 + $0x14] sm:$0xf] %v608
      %673 = vst [vmem:[%s179 + $0x18] sm:$0xf] %v609
      %674 = vst [vmem:[%s179 + $0x1c] sm:$0xf] %v610
      %675 = vst [vmem:[%s179 + $0x20] sm:$0xf] %v611
      %676 = vst [vmem:[%s179 + $0x24] sm:$0xf] %v612
      %677 = vst [vmem:[%s179 + $0x28] sm:$0xf] %v613
      %678 = vst [vmem:[%s179 + $0x2c] sm:$0xf] %v614
      %679 = vst [vmem:[%s179 + $0x30] sm:$0xf] %v615
      %680 = vst [vmem:[%s179 + $0x34] sm:$0xf] %v616
      %681 = vst [vmem:[%s179 + $0x38] sm:$0xf] %v617
      %682 = vst [vmem:[%s179 + $0x3c] sm:$0xf] %v618
      %683 = vst [vmem:[%s179 + $0x40] sm:$0xf] %v619
      %684 = vst [vmem:[%s179 + $0x44] sm:$0xf] %v620
      %685 = vst [vmem:[%s179 + $0x48] sm:$0xf] %v621
      %686 = vst [vmem:[%s179 + $0x4c] sm:$0xf] %v622
      %687 = vst [vmem:[%s179 + $0x50] sm:$0xf] %v623
      %688 = vst [vmem:[%s179 + $0x54] sm:$0xf] %v624
      %689 = vst [vmem:[%s179 + $0x58] sm:$0xf] %v625
      %690 = vst [vmem:[%s179 + $0x5c] sm:$0xf] %v626
      %691 = vst [vmem:[%s179 + $0x60] sm:$0xf] %v627
      %692 = vst [vmem:[%s179 + $0x64] sm:$0xf] %v628
      %693 = vst [vmem:[%s179 + $0x68] sm:$0xf] %v629
      %694 = vst [vmem:[%s179 + $0x6c] sm:$0xf] %v630
      %695 = vst [vmem:[%s179 + $0x70] sm:$0xf] %v631
      %696 = vst [vmem:[%s179 + $0x74] sm:$0xf] %v632
      %697 = vst [vmem:[%s179 + $0x78] sm:$0xf] %v633
      %698 = vst [vmem:[%s179 + $0x7c] sm:$0xf] %v634
      %v699 = vadd.f32 %v413, %v416
      %v700 = vadd.f32 %v699, %v421
      %v701 = vadd.f32 %v700, %v424
      %v702 = vadd.f32 %v701, %v429
      %v703 = vadd.f32 %v702, %v432
      %v704 = vadd.f32 %v703, %v437
      %v705 = vadd.f32 %v704, %v440
      %v706 = vadd.f32 %v705, %v445
      %v707 = vadd.f32 %v706, %v448
      %v708 = vadd.f32 %v707, %v453
      %v709 = vadd.f32 %v708, %v456
      %v710 = vadd.f32 %v709, %v461
      %v711 = vadd.f32 %v710, %v464
      %v712 = vadd.f32 %v711, %v469
      %v713 = vadd.f32 %v712, %v472
      %v714 = vadd.f32 %v713, %v477
      %v715 = vadd.f32 %v714, %v480
      %v716 = vadd.f32 %v715, %v485
      %v717 = vadd.f32 %v716, %v488
      %v718 = vadd.f32 %v717, %v493
      %v719 = vadd.f32 %v718, %v496
      %v720 = vadd.f32 %v719, %v501
      %v721 = vadd.f32 %v720, %v504
      %v722 = vadd.f32 %v721, %v509
      %v723 = vadd.f32 %v722, %v512
      %v724 = vadd.f32 %v723, %v517
      %v725 = vadd.f32 %v724, %v520
      %v726 = vadd.f32 %v725, %v525
      %v727 = vadd.f32 %v726, %v528
      %v728 = vadd.f32 %v727, %v533
      %v729 = vadd.f32 %v728, %v536
      %v730 = vrot.slane %v729, 4
      %v731 = vadd.f32 %v729, %v730
      %v732 = vrot.slane %v731, 2
      %v733 = vadd.f32 %v731, %v732
      %v734 = vrot.slane %v733, 1
      %v735 = vadd.f32 %v733, %v734
      %v736 = vmul.f32 %v413, %v413
      %v737 = vmul.f32 %v416, %v416
      %v738 = vmul.f32 %v421, %v421
      %v739 = vmul.f32 %v424, %v424
      %v740 = vmul.f32 %v429, %v429
      %v741 = vmul.f32 %v432, %v432
      %v742 = vmul.f32 %v437, %v437
      %v743 = vmul.f32 %v440, %v440
      %v744 = vmul.f32 %v445, %v445
      %v745 = vmul.f32 %v448, %v448
      %v746 = vmul.f32 %v453, %v453
      %v747 = vmul.f32 %v456, %v456
      %v748 = vmul.f32 %v461, %v461
      %v749 = vmul.f32 %v464, %v464
      %v750 = vmul.f32 %v469, %v469
      %v751 = vmul.f32 %v472, %v472
      %v752 = vmul.f32 %v477, %v477
      %v753 = vmul.f32 %v480, %v480
      %v754 = vmul.f32 %v485, %v485
      %v755 = vmul.f32 %v488, %v488
      %v756 = vmul.f32 %v493, %v493
      %v757 = vmul.f32 %v496, %v496
      %v758 = vmul.f32 %v501, %v501
      %v759 = vmul.f32 %v504, %v504
      %v760 = vmul.f32 %v509, %v509
      %v761 = vmul.f32 %v512, %v512
      %v762 = vmul.f32 %v517, %v517
      %v763 = vmul.f32 %v520, %v520
      %v764 = vmul.f32 %v525, %v525
      %v765 = vmul.f32 %v528, %v528
      %v766 = vmul.f32 %v533, %v533
      %v767 = vmul.f32 %v536, %v536
      %v768 = vadd.f32 %v736, %v737
      %v769 = vadd.f32 %v768, %v738
      %v770 = vadd.f32 %v769, %v739
      %v771 = vadd.f32 %v770, %v740
      %v772 = vadd.f32 %v771, %v741
      %v773 = vadd.f32 %v772, %v742
      %v774 = vadd.f32 %v773, %v743
      %v775 = vadd.f32 %v774, %v744
      %v776 = vadd.f32 %v775, %v745
      %v777 = vadd.f32 %v776, %v746
      %v778 = vadd.f32 %v777, %v747
      %v779 = vadd.f32 %v778, %v748
      %v780 = vadd.f32 %v779, %v749
      %v781 = vadd.f32 %v780, %v750
      %v782 = vadd.f32 %v781, %v751
      %v783 = vadd.f32 %v782, %v752
      %v784 = vadd.f32 %v783, %v753
      %v785 = vadd.f32 %v784, %v754
      %v786 = vadd.f32 %v785, %v755
      %v787 = vadd.f32 %v786, %v756
      %v788 = vadd.f32 %v787, %v757
      %v789 = vadd.f32 %v788, %v758
      %v790 = vadd.f32 %v789, %v759
      %v791 = vadd.f32 %v790, %v760
      %v792 = vadd.f32 %v791, %v761
      %v793 = vadd.f32 %v792, %v762
      %v794 = vadd.f32 %v793, %v763
      %v795 = vadd.f32 %v794, %v764
      %v796 = vadd.f32 %v795, %v765
      %v797 = vadd.f32 %v796, %v766
      %v798 = vadd.f32 %v797, %v767
      %v799 = vrot.slane %v798, 4
      %v800 = vadd.f32 %v798, %v799
      %v801 = vrot.slane %v800, 2
      %v802 = vadd.f32 %v800, %v801
      %v803 = vrot.slane %v802, 1
      %v804 = vadd.f32 %v802, %v803
      %v805 = vlaneseq
      %v806 = vshrl.u32 %v805, 7
      %vm807 = vcmp.lt.s32.totalorder %v806, 0
      %v808 = vsub.s32 0, %v806
      %v809 = vsel %vm807, %v808, %v806
      %v810 = vshrl.u32 %v809, 1
      %v811 = vand.u32 %v809, 1
      %v812 = vsub.s32 0, %v811
      %v813 = vsel %vm807, %v812, %v811
      %vm814 = vcmp.ne.s32.totalorder %v813, 0
      %vm815 = vcmp.lt.s32.totalorder %v813, 0
      %vm816 = vmand %vm815, %vm814
      %v817 = vadd.s32 %v813, 2
      %v818 = vsel %vm816, %v817, %v813
      %vm819 = vcmp.eq.s32.totalorder %v818, 0
      %v820 = vsel %vm819, %v735, %v804
      %821 = vst [vmem:[%s184] sm:$0xff] %v820
      %s822 = smul.u32 32, %s15
      %p823 = scmp.lt.s32.totalorder %s822, 63
      %s824 = scalar_select %p823, %s822, 63
      %s825 = smul.addr %s824, 4
      %s826 = scalar_lea.vmem %s2, %s825
      %p827 = scmp.lt.s32.totalorder %s15, 1
      %s828 = scalar_select %p827, %s15, 1
      %s829 = smul.addr %s828, 8
      %s830 = scalar_lea.vmem %s3, %s829
      // Predicated region
      $region29: #{downsample_block_forward.1} parent=27 // pred_check
        %p831 = pneg %p80
      $region30: #{downsample_block_forward.1} parent=27 // pred_check_branch
        %833 = sbr.rel (%p831) target = $region32
      $region31: #{downsample_block_forward.1} parent=27 // pred_region
        %s834 = smul.u32 32, %s15
      $region32: #{downsample_block_forward.1} parent=27 // pred_fallthru
        _
      // Predicated region
      $region33: #{downsample_block_forward.1} parent=27 // pred_check
        %p835 = pneg %p106
      $region34: #{downsample_block_forward.1} parent=27 // pred_check_branch
        %837 = sbr.rel (%p835) target = $region36
      $region35: #{downsample_block_forward.1} parent=27 // pred_region
        _
      $region36: #{downsample_block_forward.1} parent=27 // pred_fallthru
        _
    $region28: #{downsample_block_forward.1} parent=5 // pred_fallthru
      _
    %p838 = scmp.le.s32.totalorder 2, %s10
    // Predicated region
    $region37: #{downsample_block_forward.1} parent=5 // pred_check
      %p839 = pneg %p838
    $region38: #{downsample_block_forward.1} parent=5 // pred_check_branch
      %841 = sbr.rel (%p839) target = $region40
    $region39: #{downsample_block_forward.1} parent=5 // pred_region
      %s842 = ssub.s32 %s10, 2
      // Predicated region
      $region41: #{downsample_block_forward.1} parent=39 // pred_check
        %p843 = pneg %p86
      $region42: #{downsample_block_forward.1} parent=39 // pred_check_branch
        %845 = sbr.rel (%p843) target = $region44
      $region43: #{downsample_block_forward.1} parent=39 // pred_region
        %s846 = smul.u32 32, %s16
        %p847 = scmp.lt.s32.totalorder %s846, 63
        %s848 = scalar_select %p847, %s846, 63
        %s849 = smul.addr %s848, 4
        %s850 = scalar_lea.vmem %s2, %s849
      $region44: #{downsample_block_forward.1} parent=39 // pred_fallthru
        _
      // Predicated region
      $region45: #{downsample_block_forward.1} parent=39 // pred_check
        %p851 = pneg %p112
      $region46: #{downsample_block_forward.1} parent=39 // pred_check_branch
        %853 = sbr.rel (%p851) target = $region48
      $region47: #{downsample_block_forward.1} parent=39 // pred_region
        %p854 = scmp.lt.s32.totalorder %s16, 1
        %s855 = scalar_select %p854, %s16, 1
        %s856 = smul.addr %s855, 8
        %s857 = scalar_lea.vmem %s3, %s856
      $region48: #{downsample_block_forward.1} parent=39 // pred_fallthru
        _
    $region40: #{downsample_block_forward.1} parent=5 // pred_fallthru
      _
  $region6: #{downsample_block_forward.1} parent=0 // loop_footer
    %s14 = sadd.s32 1, %s10
  $region7: #{downsample_block_forward.1} parent=0 // loop_footer_branch
    %9 = sbr.rel target = $region3
  $region8: #{downsample_block_forward.1} parent=0 // loop_exit
    _

</llo_original>
